<compile_context>
chip_gen: v5e
topology: v5e:2x2
jax: 0.10.0
libtpu: 0.0.40
codegen_flags: <defaults>
</compile_context>

<pallas_src>
import functools

import jax
import jax.numpy as jnp
from jax.experimental import pallas as pl
from jax.experimental.pallas import tpu as pltpu


# ----------------------------------------------------------------------------- utilities

def _round_up(x, m):
    return ((x + m - 1) // m) * m


def _default_lane_align():
    """256 for the 256x256 MXUs (v6e/v7x), 128 otherwise (v5e & unknown)."""
    try:
        kind = jax.devices()[0].device_kind.lower()
        if "v6" in kind or "v7" in kind:
            return 256
    except Exception:
        pass
    return 128


def _vmem_capacity_bytes():
    """Physical VMEM per TensorCore (best effort; conservative fallback)."""
    try:
        return int(pltpu.get_tpu_info().vmem_capacity_bytes)
    except Exception:
        pass
    try:
        kind = jax.devices()[0].device_kind.lower()
        if "v7" in kind:
            return 64 * 1024 * 1024
        return 128 * 1024 * 1024
    except Exception:
        pass
    return 64 * 1024 * 1024  # safe everywhere


@functools.lru_cache(maxsize=1)
def _single_buffer_supported():
    """One-time capability probe for pipeline_mode=pl.Buffered(1) on a tiny kernel."""
    def _k(x_ref, o_ref):
        o_ref[...] = x_ref[...]

    try:
        x = jnp.zeros((8, 128), jnp.float32)
        out = pl.pallas_call(
            _k,
            out_shape=jax.ShapeDtypeStruct((8, 128), jnp.float32),
            grid=(1,),
            in_specs=[pl.BlockSpec((8, 128), lambda i: (0, 0),
                                   pipeline_mode=pl.Buffered(1))],
            out_specs=pl.BlockSpec((8, 128), lambda i: (0, 0)),
        )(x)
        jax.block_until_ready(out)
        return True
    except Exception:
        return False


def _resident_vmem_estimate(tile_m, d_p, h_p, o_p, x_isz, w_isz, o_isz, weight_bufs):
    weights = weight_bufs * (d_p * 2 * h_p * w_isz + h_p * o_p * w_isz
                             + 2 * h_p * 4 + o_p * 4)
    x_io = 2 * tile_m * d_p * x_isz          # double-buffered x tiles
    out_io = 2 * tile_m * o_p * o_isz        # double-buffered out tiles
    interm = (tile_m * 2 * h_p * 4           # x12 (f32)
              + tile_m * h_p * max(w_isz, 2)  # star product (compute dtype)
              + tile_m * o_p * 4)             # f32 result before cast
    return weights + x_io + out_io + interm


def _htiled_vmem_estimate(tile_m, tile_h, d_p, o_p, x_isz, w_isz, o_isz):
    x_io = 2 * tile_m * d_p * x_isz
    out_io = 2 * tile_m * o_p * o_isz
    w_io = 2 * (2 * d_p * tile_h * w_isz + 2 * tile_h * 4
                + tile_h * o_p * w_isz + o_p * 4)   # streamed weight tiles (double-buffered)
    acc = tile_m * o_p * 4
    interm = 2 * tile_m * tile_h * 4 + tile_m * tile_h * max(w_isz, 2)
    return x_io + out_io + w_io + acc + interm


# ----------------------------------------------------------------------------- kernels

def _star_mlp_resident_kernel(x_ref, w12_ref, b12_ref, wg_ref, bg_ref, o_ref, *, h_pad):
    """Weights fully VMEM-resident; one grid axis over row tiles."""
    x = x_ref[...].astype(w12_ref.dtype)

    # Fused f1/f2: single MXU matmul over the concatenated (D, 2H) weight, fp32 accumulation.
    x12 = jnp.dot(x, w12_ref[...], preferred_element_type=jnp.float32) + b12_ref[...]
    x12 = jnp.clip(x12, -1000.0, 1000.0)          # torch.clamp on both halves at once

    x1 = x12[:, :h_pad]                            # h_pad is a multiple of 128 -> aligned slice
    x2 = x12[:, h_pad:]
    s = jnp.clip(x1, 0.0, 6.0) * x2                # ReLU6(x1) * x2

    out = jnp.dot(s.astype(wg_ref.dtype), wg_ref[...],
                  preferred_element_type=jnp.float32) + bg_ref[...]
    o_ref[...] = out.astype(o_ref.dtype)


def _star_mlp_htiled_kernel(x_ref, w1_ref, w2_ref, b1_ref, b2_ref, wg_ref, bg_ref,
                            o_ref, acc_ref):
    """Hidden dimension tiled (grid = (row tiles, hidden tiles)); f32 accumulator in scratch."""
    h = pl.program_id(1)

    @pl.when(h == 0)
    def _():
        acc_ref[...] = jnp.zeros_like(acc_ref)

    x = x_ref[...].astype(w1_ref.dtype)
    x1 = jnp.dot(x, w1_ref[...], preferred_element_type=jnp.float32) + b1_ref[...]
    x2 = jnp.dot(x, w2_ref[...], preferred_element_type=jnp.float32) + b2_ref[...]
    x1 = jnp.clip(x1, -1000.0, 1000.0)
    x2 = jnp.clip(x2, -1000.0, 1000.0)
    s = jnp.clip(x1, 0.0, 6.0) * x2

    acc_ref[...] += jnp.dot(s.astype(wg_ref.dtype), wg_ref[...],
                            preferred_element_type=jnp.float32)

    @pl.when(h == pl.num_programs(1) - 1)
    def _():
        o_ref[...] = (acc_ref[...] + bg_ref[...]).astype(o_ref.dtype)


# ----------------------------------------------------------------------------- pallas wrappers

@functools.partial(jax.jit,
                   static_argnames=("tile_m", "h_pad", "out_dim", "single_buffer", "vmem_limit"))
def _forward_resident(x2d, w12, b12, wg, bg, *, tile_m, h_pad, out_dim, single_buffer,
                      vmem_limit):
    M, D = x2d.shape
    D_p = w12.shape[0]
    O_p = wg.shape[1]
    M_p = _round_up(max(M, 1), tile_m)
    x_p = jnp.pad(x2d, ((0, M_p - M), (0, D_p - D)))

    def w_spec(shape):
        idx = lambda i: (0,) * len(shape)
        if single_buffer:
            # Grid-invariant operand: the second pipeline buffer is wasted VMEM.
            return pl.BlockSpec(shape, idx, pipeline_mode=pl.Buffered(1))
        return pl.BlockSpec(shape, idx)

    kernel = functools.partial(_star_mlp_resident_kernel, h_pad=h_pad)
    out_p = pl.pallas_call(
        kernel,
        out_shape=jax.ShapeDtypeStruct((M_p, O_p), x2d.dtype),
        grid_spec=pltpu.PrefetchScalarGridSpec(
            num_scalar_prefetch=0,
            grid=(M_p // tile_m,),
            in_specs=[
                pl.BlockSpec((tile_m, D_p), lambda i: (i, 0)),   # x rows (pipelined)
                w_spec((D_p, 2 * h_pad)),                        # W1 || W2 (resident)
                w_spec((1, 2 * h_pad)),                          # b1 || b2
                w_spec((h_pad, O_p)),                            # Wg
                w_spec((1, O_p)),                                # bg
            ],
            out_specs=pl.BlockSpec((tile_m, O_p), lambda i: (i, 0)),
        ),
        compiler_params=pltpu.CompilerParams(
            dimension_semantics=("parallel",),
            vmem_limit_bytes=vmem_limit,
        ),
    )(x_p, w12, b12, wg, bg)
    return out_p[:M, :out_dim]


@functools.partial(jax.jit,
                   static_argnames=("tile_m", "tile_h", "out_dim", "vmem_limit"))
def _forward_htiled(x2d, w12, b12, wg, bg, *, tile_m, tile_h, out_dim, vmem_limit):
    M, D = x2d.shape
    D_p = w12.shape[0]
    H_p, O_p = wg.shape
    n_h = H_p // tile_h
    M_p = _round_up(max(M, 1), tile_m)
    x_p = jnp.pad(x2d, ((0, M_p - M), (0, D_p - D)))

    out_p = pl.pallas_call(
        _star_mlp_htiled_kernel,
        out_shape=jax.ShapeDtypeStruct((M_p, O_p), x2d.dtype),
        grid_spec=pltpu.PrefetchScalarGridSpec(
            num_scalar_prefetch=0,
            grid=(M_p // tile_m, n_h),
            in_specs=[
                pl.BlockSpec((tile_m, D_p), lambda i, h: (i, 0)),        # x rows (const over h)
                pl.BlockSpec((D_p, tile_h), lambda i, h: (0, h)),        # W1 tile (from W12)
                pl.BlockSpec((D_p, tile_h), lambda i, h: (0, h + n_h)),  # W2 tile (from W12)
                pl.BlockSpec((1, tile_h), lambda i, h: (0, h)),          # b1 tile
                pl.BlockSpec((1, tile_h), lambda i, h: (0, h + n_h)),    # b2 tile
                pl.BlockSpec((tile_h, O_p), lambda i, h: (h, 0)),        # Wg tile
                pl.BlockSpec((1, O_p), lambda i, h: (0, 0)),             # bg
            ],
            out_specs=pl.BlockSpec((tile_m, O_p), lambda i, h: (i, 0)),
            scratch_shapes=[pltpu.VMEM((tile_m, O_p), jnp.float32)],
        ),
        compiler_params=pltpu.CompilerParams(
            dimension_semantics=("parallel", "arbitrary"),
            vmem_limit_bytes=vmem_limit,
        ),
    )(x_p, w12, w12, b12, b12, wg, bg)
    return out_p[:M, :out_dim]


# ----------------------------------------------------------------------------- public API

def prepare_star_mlp_params(params, *, compute_dtype=None, lane_align=None, tile_h=512):
    """Pad, fuse and (optionally) cast the weights ONCE; reuse the result every forward."""
    if compute_dtype is None:
        compute_dtype = params["w1"].dtype
    if lane_align is None:
        lane_align = _default_lane_align()

    w1, w2, wg = params["w1"], params["w2"], params["wg"]
    b1 = jnp.reshape(params["b1"], (1, -1))
    b2 = jnp.reshape(params["b2"], (1, -1))
    bg = jnp.reshape(params["bg"], (1, -1))

    D, H = w1.shape
    O = wg.shape[1]

    D_p = _round_up(D, 128)                 # contracting dim: 128-lane alignment is enough
    H_p = _round_up(H, lane_align)          # MXU N-dim alignment (128 v5e / 256 v6e,v7x)
    O_p = _round_up(O, lane_align)

    # Pick a hidden tile size for the H-tiled path and make H_p an exact multiple of it.
    n_h = max(1, pl.cdiv(H_p, tile_h))
    tile_h_eff = _round_up(pl.cdiv(H_p, n_h), lane_align)
    H_p = n_h * tile_h_eff

    # Zero padding keeps the math exact: padded input cols hit zero weight rows, padded hidden
    # cols produce zeros through clamp/ReLU6/mul and hit zero Wg rows, padded output cols are
    # sliced off in the wrapper.
    w1_p = jnp.pad(w1, ((0, D_p - D), (0, H_p - H))).astype(compute_dtype)
    w2_p = jnp.pad(w2, ((0, D_p - D), (0, H_p - H))).astype(compute_dtype)
    b1_p = jnp.pad(b1, ((0, 0), (0, H_p - H))).astype(jnp.float32)
    b2_p = jnp.pad(b2, ((0, 0), (0, H_p - H))).astype(jnp.float32)

    return {
        "w12": jnp.concatenate([w1_p, w2_p], axis=1),            # (D_p, 2*H_p)
        "b12": jnp.concatenate([b1_p, b2_p], axis=1),            # (1, 2*H_p), f32
        "wg": jnp.pad(wg, ((0, H_p - H), (0, O_p - O))).astype(compute_dtype),
        "bg": jnp.pad(bg, ((0, 0), (0, O_p - O))).astype(jnp.float32),
        "meta": dict(D=D, H=H, O=O, D_p=D_p, H_p=H_p, O_p=O_p,
                     tile_h=tile_h_eff, compute_dtype=jnp.dtype(compute_dtype)),
    }


def star_mlp_forward(hidden_states, prepared, *, tile_m=None, force_h_tiled=False,
                     check_finite=False):
    """hidden_states: (..., input_dim); prepared: output of prepare_star_mlp_params."""
    meta = prepared["meta"]
    *lead, D = hidden_states.shape
    assert D == meta["D"], f"expected last dim {meta['D']}, got {D}"
    x2d = hidden_states.reshape(-1, D)
    M = x2d.shape[0]

    vmem_cap = _vmem_capacity_bytes()
    vmem_limit = int(0.75 * vmem_cap)       # ~96 MiB on v5e/v6e, ~48 MiB on v7x

    if tile_m is None:
        tile_m = 512 if vmem_cap >= 96 * 1024 * 1024 else 256
    tile_m = _round_up(max(8, min(tile_m, _round_up(max(M, 1), 8))), 8)
    # Prefer >=2 row tiles so a 2-TensorCore chip (v7x) can shard the parallel axis.
    if M > 8 and pl.cdiv(M, tile_m) < 2:
        tile_m = _round_up(pl.cdiv(M, 2), 8)

    x_isz = x2d.dtype.itemsize
    w_isz = meta["compute_dtype"].itemsize
    o_isz = x_isz

    single_buffer = _single_buffer_supported()
    weight_bufs = 1 if single_buffer else 2
    budget = int(0.85 * vmem_limit)
    resident_est = _resident_vmem_estimate(tile_m, meta["D_p"], meta["H_p"], meta["O_p"],
                                           x_isz, w_isz, o_isz, weight_bufs)
    use_htiled = force_h_tiled or resident_est > budget

    args = (x2d, prepared["w12"], prepared["b12"], prepared["wg"], prepared["bg"])
    if not use_htiled:
        out2d = _forward_resident(*args, tile_m=tile_m, h_pad=meta["H_p"],
                                  out_dim=meta["O"], single_buffer=single_buffer,
                                  vmem_limit=vmem_limit)
    else:
        tile_h = meta["tile_h"]
        while (tile_m > 8 and
               _htiled_vmem_estimate(tile_m, tile_h, meta["D_p"], meta["O_p"],
                                     x_isz, w_isz, o_isz) > budget):
            tile_m = max(8, _round_up(tile_m // 2, 8))
        out2d = _forward_htiled(*args, tile_m=tile_m, tile_h=tile_h,
                                out_dim=meta["O"], vmem_limit=vmem_limit)

    out = out2d.reshape(*lead, meta["O"])

    if check_finite:
        # Debug-only mirror of the PyTorch runtime asserts (forces a device->host sync;
        # do NOT enable inside jit/vmap).
        assert not bool(jnp.isnan(out).any()), "Output contains NaN"
        assert not bool(jnp.isinf(out).any()), "Output contains infinite values"
    return out


# ----------------------------------------------------------------------------- init + reference

def init_star_mlp_params(key, input_dim, output_dim, width_factor, dtype=jnp.float32):
    """Deterministic init matching nn.Linear shapes (weights stored transposed)."""
    hidden = width_factor * input_dim
    k1, k2, k3, k4, k5, k6 = jax.random.split(key, 6)

    def lin(kw, kb, fan_in, fan_out):
        bound = 1.0 / (fan_in ** 0.5)
        w = jax.random.uniform(kw, (fan_in, fan_out), dtype, -bound, bound)
        b = jax.random.uniform(kb, (1, fan_out), dtype, -bound, bound)
        return w, b

    w1, b1 = lin(k1, k2, input_dim, hidden)
    w2, b2 = lin(k3, k4, input_dim, hidden)
    wg, bg = lin(k5, k6, hidden, output_dim)
    return {"w1": w1, "b1": b1, "w2": w2, "b2": b2, "wg": wg, "bg": bg}


def star_mlp_reference(hidden_states, params):
    x = hidden_states.astype(jnp.float32)
    x1 = x @ params["w1"] + params["b1"].reshape(-1)
    x2 = x @ params["w2"] + params["b2"].reshape(-1)
    x1 = jnp.clip(x1, -1000.0, 1000.0)
    x2 = jnp.clip(x2, -1000.0, 1000.0)
    s = jnp.clip(x1, 0.0, 6.0) * x2
    return s @ params["wg"] + params["bg"].reshape(-1)


if __name__ == "__main__":
    # Small shapes consistent with the module: batch=2, seq=8, input_dim=32,
    # width_factor=4 (hidden=128), output_dim=32.
    batch, seq, input_dim, width_factor, output_dim = 2, 8, 32, 4, 32

    key = jax.random.PRNGKey(0)
    k_params, k_x = jax.random.split(key)
    params = init_star_mlp_params(k_params, input_dim, output_dim, width_factor)
    x = jax.random.normal(k_x, (batch, seq, input_dim), dtype=jnp.float32)
    ref = star_mlp_reference(x, params)

    # 1) f32 resident path (bit-for-bit semantics of the PyTorch module).
    prep_f32 = prepare_star_mlp_params(params)            # compute dtype = param dtype (f32)
    out = jax.block_until_ready(star_mlp_forward(x, prep_f32))
    assert out.shape == (batch, seq, output_dim)
    assert jnp.allclose(out, ref, atol=1e-4, rtol=1e-4), "f32 resident path mismatch"

    # 2) bf16 weights/activations on the MXU (recommended fast path) -- looser tolerance.
    prep_bf16 = prepare_star_mlp_params(params, compute_dtype=jnp.bfloat16)
    out_bf16 = jax.block_until_ready(star_mlp_forward(x, prep_bf16))
    assert jnp.allclose(out_bf16, ref, atol=5e-2, rtol=5e-2), "bf16 resident path mismatch"

    # 3) H-tiled accumulator path (forced): hidden=384 split into 3 tiles of 128.
    params2 = init_star_mlp_params(jax.random.PRNGKey(1), 48, 24, 8)   # hidden = 384
    x2 = jax.random.normal(jax.random.PRNGKey(2), (4, 16, 48), dtype=jnp.float32)
    prep2 = prepare_star_mlp_params(params2, lane_align=128, tile_h=128)
    out2 = jax.block_until_ready(star_mlp_forward(x2, prep2, force_h_tiled=True))
    ref2 = star_mlp_reference(x2, params2)
    assert out2.shape == (4, 16, 24)
    assert jnp.allclose(out2, ref2, atol=1e-4, rtol=1e-4), "H-tiled path mismatch"

    print("KERNEL_OK")
</pallas_src>

<mosaic_0001>
module attributes {stable_mosaic.version = 11 : i64} {
  func.func @_k(%arg0: i32, %arg1: memref<8x128xf32, #tpu.memory_space<vmem>>, %arg2: memref<8x128xf32, #tpu.memory_space<vmem>>) attributes {dimension_semantics = [#tpu.dimension_semantics<arbitrary>], iteration_bounds = array<i64: 1>, scalar_prefetch = 0 : i64, scratch_operands = 0 : i64, tpu.core_type = #tpu.core_type<tc>, window_params = [{pipeline_mode = #tpu.pipeline_mode<synchronous>, transform_indices = @transform_0, window_bounds = array<i64: 8, 128>}, {pipeline_mode = #tpu.pipeline_mode<synchronous>, transform_indices = @transform_1, window_bounds = array<i64: 8, 128>}]} {
    %c0 = arith.constant 0 : index
    %c0_0 = arith.constant 0 : index
    %0 = vector.load %arg1[%c0, %c0_0] : memref<8x128xf32, #tpu.memory_space<vmem>>, vector<8x128xf32>
    %c0_1 = arith.constant 0 : index
    %c0_2 = arith.constant 0 : index
    %1 = vector.load %arg2[%c0_1, %c0_2] : memref<8x128xf32, #tpu.memory_space<vmem>>, vector<8x128xf32>
    tpu.vector_store %arg2[%c0_1, %c0_2], %0 {strides = array<i32>} : memref<8x128xf32, #tpu.memory_space<vmem>>, vector<8x128xf32>,
    return
  }
  func.func @transform_0(%arg0: i32) -> (i32, i32) {
    %c0_i32 = arith.constant 0 : i32
    %c0_i32_0 = arith.constant 0 : i32
    %c0_i32_1 = arith.constant 0 : i32
    return %c0_i32, %c0_i32_0 : i32, i32
  }
  func.func @transform_1(%arg0: i32) -> (i32, i32) {
    %c0_i32 = arith.constant 0 : i32
    %c0_i32_0 = arith.constant 0 : i32
    %c0_i32_1 = arith.constant 0 : i32
    return %c0_i32, %c0_i32_0 : i32, i32
  }
}

module attributes {stable_mosaic.version = 11 : i64} {
  func.func @_star_mlp_resident_kernel(%arg0: i32, %arg1: memref<8x128xf32, #tpu.memory_space<vmem>>, %arg2: memref<128x256xf32, #tpu.memory_space<vmem>>, %arg3: memref<1x256xf32, #tpu.memory_space<vmem>>, %arg4: memref<128x128xf32, #tpu.memory_space<vmem>>, %arg5: memref<1x128xf32, #tpu.memory_space<vmem>>, %arg6: memref<8x128xf32, #tpu.memory_space<vmem>>) attributes {dimension_semantics = [#tpu.dimension_semantics<parallel>], iteration_bounds = array<i64: 2>, scalar_prefetch = 0 : i64, scratch_operands = 0 : i64, tpu.core_type = #tpu.core_type<tc>, window_params = [{transform_indices = @transform_0, window_bounds = array<i64: 8, 128>}, {pipeline_mode = #tpu.pipeline_mode<synchronous>, transform_indices = @transform_1, window_bounds = array<i64: 128, 256>}, {pipeline_mode = #tpu.pipeline_mode<synchronous>, transform_indices = @transform_2, window_bounds = array<i64: 1, 256>}, {pipeline_mode = #tpu.pipeline_mode<synchronous>, transform_indices = @transform_3, window_bounds = array<i64: 128, 128>}, {pipeline_mode = #tpu.pipeline_mode<synchronous>, transform_indices = @transform_4, window_bounds = array<i64: 1, 128>}, {transform_indices = @transform_5, window_bounds = array<i64: 8, 128>}]} {
    %c0 = arith.constant 0 : index
    %c0_0 = arith.constant 0 : index
    %0 = vector.load %arg1[%c0, %c0_0] : memref<8x128xf32, #tpu.memory_space<vmem>>, vector<8x128xf32>
    %c0_1 = arith.constant 0 : index
    %c0_2 = arith.constant 0 : index
    %1 = vector.load %arg2[%c0_1, %c0_2] : memref<128x256xf32, #tpu.memory_space<vmem>>, vector<128x256xf32>
    %cst = arith.constant dense<0.000000e+00> : vector<8x256xf32>
    %2 = tpu.matmul %0, %1, %cst {dimension_numbers = #tpu.dot_dimension_numbers<[1], [0], [0], [1], [0, 0, 1, 1], [], []>} : vector<8x128xf32>, vector<128x256xf32>, vector<8x256xf32> -> vector<8x256xf32>
    %c0_3 = arith.constant 0 : index
    %c0_4 = arith.constant 0 : index
    %3 = vector.load %arg3[%c0_3, %c0_4] : memref<1x256xf32, #tpu.memory_space<vmem>>, vector<1x256xf32>
    %4 = vector.broadcast %3 : vector<1x256xf32> to vector<8x256xf32>
    %5 = arith.addf %2, %4 : vector<8x256xf32>
    %cst_5 = arith.constant -1.000000e+03 : f32
    %cst_6 = arith.constant 1.000000e+03 : f32
    %6 = vector.broadcast %cst_5 : f32 to vector<8x256xf32>
    %7 = arith.maximumf %6, %5 : vector<8x256xf32>
    %8 = vector.broadcast %cst_6 : f32 to vector<8x256xf32>
    %9 = arith.minimumf %8, %7 : vector<8x256xf32>
    %10 = vector.extract_strided_slice %9 {offsets = [0, 0], sizes = [8, 128], strides = [1, 1]} : vector<8x256xf32> to vector<8x128xf32>
    %11 = vector.extract_strided_slice %9 {offsets = [0, 128], sizes = [8, 128], strides = [1, 1]} : vector<8x256xf32> to vector<8x128xf32>
    %cst_7 = arith.constant 0.000000e+00 : f32
    %cst_8 = arith.constant 6.000000e+00 : f32
    %12 = vector.broadcast %cst_7 : f32 to vector<8x128xf32>
    %13 = arith.maximumf %12, %10 : vector<8x128xf32>
    %14 = vector.broadcast %cst_8 : f32 to vector<8x128xf32>
    %15 = arith.minimumf %14, %13 : vector<8x128xf32>
    %16 = arith.mulf %15, %11 : vector<8x128xf32>
    %c0_9 = arith.constant 0 : index
    %c0_10 = arith.constant 0 : index
    %17 = vector.load %arg4[%c0_9, %c0_10] : memref<128x128xf32, #tpu.memory_space<vmem>>, vector<128x128xf32>
    %cst_11 = arith.constant dense<0.000000e+00> : vector<8x128xf32>
    %18 = tpu.matmul %16, %17, %cst_11 {dimension_numbers = #tpu.dot_dimension_numbers<[1], [0], [0], [1], [0, 0, 1, 1], [], []>} : vector<8x128xf32>, vector<128x128xf32>, vector<8x128xf32> -> vector<8x128xf32>
    %c0_12 = arith.constant 0 : index
    %c0_13 = arith.constant 0 : index
    %19 = vector.load %arg5[%c0_12, %c0_13] : memref<1x128xf32, #tpu.memory_space<vmem>>, vector<1x128xf32>
    %20 = vector.broadcast %19 : vector<1x128xf32> to vector<8x128xf32>
    %21 = arith.addf %18, %20 : vector<8x128xf32>
    %c0_14 = arith.constant 0 : index
    %c0_15 = arith.constant 0 : index
    %22 = vector.load %arg6[%c0_14, %c0_15] : memref<8x128xf32, #tpu.memory_space<vmem>>, vector<8x128xf32>
    tpu.vector_store %arg6[%c0_14, %c0_15], %21 {strides = array<i32>} : memref<8x128xf32, #tpu.memory_space<vmem>>, vector<8x128xf32>,
    return
  }
  func.func @transform_0(%arg0: i32) -> (i32, i32) {
    %c0_i32 = arith.constant 0 : i32
    %c0_i32_0 = arith.constant 0 : i32
    return %arg0, %c0_i32 : i32, i32
  }
  func.func @transform_1(%arg0: i32) -> (i32, i32) {
    %c0_i32 = arith.constant 0 : i32
    %c0_i32_0 = arith.constant 0 : i32
    %c0_i32_1 = arith.constant 0 : i32
    return %c0_i32, %c0_i32_0 : i32, i32
  }
  func.func @transform_2(%arg0: i32) -> (i32, i32) {
    %c0_i32 = arith.constant 0 : i32
    %c0_i32_0 = arith.constant 0 : i32
    %c0_i32_1 = arith.constant 0 : i32
    return %c0_i32, %c0_i32_0 : i32, i32
  }
  func.func @transform_3(%arg0: i32) -> (i32, i32) {
    %c0_i32 = arith.constant 0 : i32
    %c0_i32_0 = arith.constant 0 : i32
    %c0_i32_1 = arith.constant 0 : i32
    return %c0_i32, %c0_i32_0 : i32, i32
  }
  func.func @transform_4(%arg0: i32) -> (i32, i32) {
    %c0_i32 = arith.constant 0 : i32
    %c0_i32_0 = arith.constant 0 : i32
    %c0_i32_1 = arith.constant 0 : i32
    return %c0_i32, %c0_i32_0 : i32, i32
  }
  func.func @transform_5(%arg0: i32) -> (i32, i32) {
    %c0_i32 = arith.constant 0 : i32
    %c0_i32_0 = arith.constant 0 : i32
    return %arg0, %c0_i32 : i32, i32
  }
}

</mosaic_0001>

<llo_original>
// kernel: tpu_custom_call.1
$region0: #{tpu_custom_call.1}
  #allocation0 [shape = 'u32[]', space=smem, size = 0x4, offset = 0x4, fixed_abs, tag = 'smem constant byte address 0x4 - core index']
  #allocation1 [shape = 'u32[72,128]{1,0:T(1,128)}', space=vmem, size = 0x9000, scoped, tag = 'internal scratch']
  %s0 = inlined_call_operand.hbm [shape: f32[8,128], index: 0, kind: input, shape index: {}]
  %s1 = inlined_call_operand.hbm [shape: f32[8,128], index: 1, kind: output, shape index: {}]
  %s2 = sld [smem:[#allocation0]]
  $region18: #{tpu_custom_call.1} parent=0
    _
  %s4 = ssub.s32 1, %s2
  %s5 = scalar_select 0, %s4, %s2
  $region1: #{tpu_custom_call.1} parent=0
    #allocation2 [shape = 'u8[4096]{0}', space=vmem, size = 0x1000, scoped, tag = 'input window, operand 0, single buffered']
    #allocation3 [shape = 's32[1]{0}', space=sflag, size = 0x4, scoped, tag = 'scoped memory for tpu_custom_call.1']
    #allocation4 [shape = 's32[1]{0}', space=sflag, size = 0x4, scoped, tag = 'scoped memory for tpu_custom_call.1']
    #allocation5 [shape = 'u8[4096]{0}', space=vmem, size = 0x1000, scoped, tag = 'output window, operand 0, single buffered']
    %6 = vsyncpa [#allocation3], 0
    %7 = vsyncpa [#allocation4], 0
    // Predicated region
    $region2: #{tpu_custom_call.1} parent=1 // pred_check
      _
    $region3: #{tpu_custom_call.1} parent=1 // pred_check_branch
      %9 = sbr.rel (0) target = $region5
    $region4: #{tpu_custom_call.1} parent=1 // pred_region
      %11 = vsyncadd [#allocation3], 0
      %s13 = sshll.u32 %s0, 4
      %s14 = int_to_ptr.hbm [resolvable:$true] %s13
      %s15 = sshll.u32 [#allocation2], 4
      %s16 = int_to_ptr.vmem [resolvable:$true] %s15
      %18 = dma.hbm_to_vmem [thread:$0]  %s14, 128, %s16, [#allocation3]
    $region5: #{tpu_custom_call.1} parent=1 // pred_fallthru
      _
    // Predicated region
    $region6: #{tpu_custom_call.1} parent=1 // pred_check
      _
    $region7: #{tpu_custom_call.1} parent=1 // pred_check_branch
      %20 = sbr.rel (0) target = $region9
    $region8: #{tpu_custom_call.1} parent=1 // pred_region
      %22 = dma.done [#allocation3], 128
    $region9: #{tpu_custom_call.1} parent=1 // pred_fallthru
      _
    %v23 = vld [vmem:[#allocation2] sm:$0xff]
    %24 = vst [vmem:[#allocation5] sm:$0xff] %v23
    // Predicated region
    $region10: #{tpu_custom_call.1} parent=1 // pred_check
      _
    $region11: #{tpu_custom_call.1} parent=1 // pred_check_branch
      %26 = sbr.rel (0) target = $region13
    $region12: #{tpu_custom_call.1} parent=1 // pred_region
      %28 = vsyncadd [#allocation4], 0
      %s30 = sshll.u32 [#allocation5], 4
      %s31 = int_to_ptr.vmem [resolvable:$true] %s30
      %s32 = sshll.u32 %s1, 4
      %s33 = int_to_ptr.hbm [resolvable:$true] %s32
      %35 = dma.vmem_to_hbm [thread:$0]  %s31, 128, %s33, [#allocation4]
    $region13: #{tpu_custom_call.1} parent=1 // pred_fallthru
      _
    // Predicated region
    $region14: #{tpu_custom_call.1} parent=1 // pred_check
      _
    $region15: #{tpu_custom_call.1} parent=1 // pred_check_branch
      %37 = sbr.rel (0) target = $region17
    $region16: #{tpu_custom_call.1} parent=1 // pred_region
      %39 = dma.done [#allocation4], 128
    $region17: #{tpu_custom_call.1} parent=1 // pred_fallthru
      _
    %40 = vsyncpa [#allocation3], 1
    %41 = vsyncpa [#allocation4], 1

// kernel: _forward_resident.1
$region0: #{_forward_resident.1}
  #allocation0 [shape = 'u32[]', space=smem, size = 0x4, offset = 0x4, fixed_abs, tag = 'smem constant byte address 0x4 - core index']
  #allocation1 [shape = 'u32[72,128]{1,0:T(1,128)}', space=vmem, size = 0x9000, scoped, tag = 'internal scratch']
  %s0 = inlined_call_operand.vmem [shape: f32[16,128], index: 0, kind: input, shape index: {}]
  %s1 = inlined_call_operand.hbm [shape: f32[128,256], index: 1, kind: input, shape index: {}]
  %s2 = inlined_call_operand.vmem [shape: f32[1,256], index: 2, kind: input, shape index: {}]
  %s3 = inlined_call_operand.hbm [shape: f32[128,128], index: 3, kind: input, shape index: {}]
  %s4 = inlined_call_operand.vmem [shape: f32[1,128], index: 4, kind: input, shape index: {}]
  %s5 = inlined_call_operand.hbm [shape: f32[16,128], index: 5, kind: output, shape index: {}]
  %s6 = sld [smem:[#allocation0]]
  $region61: #{_forward_resident.1} parent=0
    _
  %s8 = ssub.s32 1, %s6
  %s9 = scalar_select 0, %s8, %s6
  $region1: #{_forward_resident.1} parent=0
    #allocation2 [shape = 'u8[131072]{0}', space=vmem, size = 0x20000, scoped, tag = 'input window, operand 1, single buffered']
    #allocation3 [shape = 's32[2]{0}', space=sflag, size = 0x8, scoped, tag = 'scoped memory for _forward_resident.1']
    #allocation4 [shape = 's32[2]{0}', space=sflag, size = 0x8, scoped, tag = 'scoped memory for _forward_resident.1']
    #allocation5 [shape = 'u8[65536]{0}', space=vmem, size = 0x10000, scoped, tag = 'input window, operand 3, single buffered']
    #allocation6 [shape = 's32[1]{0}', space=sflag, size = 0x4, scoped, tag = 'scoped memory for _forward_resident.1']
    #allocation7 [shape = 'u8[8192]{0}', space=vmem, size = 0x2000, scoped, tag = 'output window, operand 0']
    %10 = vsyncpa [#allocation3], 0
    %11 = vsyncpa [#allocation6], 0
    %12 = vsyncpa [#allocation4], 0
    %s13 = scalar_lea.sflag [#allocation4], 1
    %14 = vsyncpa %s13, 0
    loop: start=0, step=1, limit=4
    $region2: #{_forward_resident.1} parent=1 // loop_pre_header
      _
    $region3: #{_forward_resident.1} parent=1 // loop_header
      %s16 = sphi 0, %s20
      %p17 = scmp.ge.s32.totalorder %s16, 4
      %s26 = sphi 0, %s28
      %s29 = sphi 0, %s26
      %s30 = sphi 0, %s29
      %s46 = sphi 0, %s30
      %s50 = sphi 0, %s50
      %s52 = sphi 0, %s50
      %s53 = sphi 0, %s52
      %s67 = sphi 0, %s53
      %s71 = sphi 0, %s71
      %s73 = sphi 0, %s71
      %s74 = sphi 0, %s73
      %s88 = sphi 0, %s74
      %s92 = sphi 0, %s92
      %s94 = sphi 0, %s92
      %s95 = sphi 0, %s94
      %s109 = sphi 0, %s95
      %s113 = sphi 0, %s113
      %s115 = sphi 0, %s113
      %s116 = sphi 0, %s115
      %s130 = sphi 0, %s116
      %s136 = sphi 0, %s138
      %s139 = sphi 0, %s136
      %s140 = sphi 0, %s139
      %s156 = sphi 0, %s140
    $region4: #{_forward_resident.1} parent=1 // loop_header_branch
      %19 = sbr.rel (%p17) target = $region8
    $region5: #{_forward_resident.1} parent=1 // loop_body
      %s21 = ssub.s32 %s16, 1
      %s22 = ssub.s32 %s16, 2
      %s23 = sadd.s32 %s16, 1
      %s24 = ssub.s32 %s16, %s23
      %p25 = scmp.eq.s32.totalorder %s24, 0
      %s27 = sadd.s32 %s26, 1
      %s28 = scalar_select %p25, %s26, %s27
      %p31 = pneg %p25
      %p32 = scmp.eq.s32.totalorder %s16, 1
      %p33 = por %p31, %p32
      %p34 = scmp.ne.s32.totalorder %s26, %s29
      %p35 = scmp.eq.s32.totalorder %s16, 0
      %p36 = por %p34, %p35
      %p37 = scmp.ne.s32.totalorder %s26, %s29
      %p38 = scmp.eq.s32.totalorder %s21, 1
      %p39 = por %p37, %p38
      %p40 = scmp.ne.s32.totalorder %s29, %s30
      %p41 = scmp.eq.s32.totalorder %s21, 0
      %p42 = por %p40, %p41
      %p43 = scmp.ne.s32.totalorder %s29, %s30
      %p44 = scmp.eq.s32.totalorder %s22, 1
      %p45 = por %p43, %p44
      %p47 = scmp.ne.s32.totalorder %s30, %s46
      %p48 = scmp.eq.s32.totalorder %s22, 0
      %p49 = por %p47, %p48
      %s51 = sadd.s32 %s50, 1
      %p54 = scmp.eq.s32.totalorder %s16, 1
      %p55 = scmp.ne.s32.totalorder %s50, %s52
      %p56 = scmp.eq.s32.totalorder %s16, 0
      %p57 = por %p55, %p56
      %p58 = scmp.ne.s32.totalorder %s50, %s52
      %p59 = scmp.eq.s32.totalorder %s21, 1
      %p60 = por %p58, %p59
      %p61 = scmp.ne.s32.totalorder %s52, %s53
      %p62 = scmp.eq.s32.totalorder %s21, 0
      %p63 = por %p61, %p62
      %p64 = scmp.ne.s32.totalorder %s52, %s53
      %p65 = scmp.eq.s32.totalorder %s22, 1
      %p66 = por %p64, %p65
      %p68 = scmp.ne.s32.totalorder %s53, %s67
      %p69 = scmp.eq.s32.totalorder %s22, 0
      %p70 = por %p68, %p69
      %s72 = sadd.s32 %s71, 1
      %p75 = scmp.eq.s32.totalorder %s16, 1
      %p76 = scmp.ne.s32.totalorder %s71, %s73
      %p77 = scmp.eq.s32.totalorder %s16, 0
      %p78 = por %p76, %p77
      %p79 = scmp.ne.s32.totalorder %s71, %s73
      %p80 = scmp.eq.s32.totalorder %s21, 1
      %p81 = por %p79, %p80
      %p82 = scmp.ne.s32.totalorder %s73, %s74
      %p83 = scmp.eq.s32.totalorder %s21, 0
      %p84 = por %p82, %p83
      %p85 = scmp.ne.s32.totalorder %s73, %s74
      %p86 = scmp.eq.s32.totalorder %s22, 1
      %p87 = por %p85, %p86
      %p89 = scmp.ne.s32.totalorder %s74, %s88
      %p90 = scmp.eq.s32.totalorder %s22, 0
      %p91 = por %p89, %p90
      %s93 = sadd.s32 %s92, 1
      %p96 = scmp.eq.s32.totalorder %s16, 1
      %p97 = scmp.ne.s32.totalorder %s92, %s94
      %p98 = scmp.eq.s32.totalorder %s16, 0
      %p99 = por %p97, %p98
      %p100 = scmp.ne.s32.totalorder %s92, %s94
      %p101 = scmp.eq.s32.totalorder %s21, 1
      %p102 = por %p100, %p101
      %p103 = scmp.ne.s32.totalorder %s94, %s95
      %p104 = scmp.eq.s32.totalorder %s21, 0
      %p105 = por %p103, %p104
      %p106 = scmp.ne.s32.totalorder %s94, %s95
      %p107 = scmp.eq.s32.totalorder %s22, 1
      %p108 = por %p106, %p107
      %p110 = scmp.ne.s32.totalorder %s95, %s109
      %p111 = scmp.eq.s32.totalorder %s22, 0
      %p112 = por %p110, %p111
      %s114 = sadd.s32 %s113, 1
      %p117 = scmp.eq.s32.totalorder %s16, 1
      %p118 = scmp.ne.s32.totalorder %s113, %s115
      %p119 = scmp.eq.s32.totalorder %s16, 0
      %p120 = por %p118, %p119
      %p121 = scmp.ne.s32.totalorder %s113, %s115
      %p122 = scmp.eq.s32.totalorder %s21, 1
      %p123 = por %p121, %p122
      %p124 = scmp.ne.s32.totalorder %s115, %s116
      %p125 = scmp.eq.s32.totalorder %s21, 0
      %p126 = por %p124, %p125
      %p127 = scmp.ne.s32.totalorder %s115, %s116
      %p128 = scmp.eq.s32.totalorder %s22, 1
      %p129 = por %p127, %p128
      %p131 = scmp.ne.s32.totalorder %s116, %s130
      %p132 = scmp.eq.s32.totalorder %s22, 0
      %p133 = por %p131, %p132
      %s134 = ssub.s32 %s16, %s23
      %p135 = scmp.eq.s32.totalorder %s134, 0
      %s137 = sadd.s32 %s136, 1
      %s138 = scalar_select %p135, %s136, %s137
      %p141 = pneg %p135
      %p142 = scmp.eq.s32.totalorder %s16, 1
      %p143 = por %p141, %p142
      %p144 = scmp.ne.s32.totalorder %s136, %s139
      %p145 = scmp.eq.s32.totalorder %s16, 0
      %p146 = por %p144, %p145
      %p147 = scmp.ne.s32.totalorder %s136, %s139
      %p148 = scmp.eq.s32.totalorder %s21, 1
      %p149 = por %p147, %p148
      %p150 = scmp.ne.s32.totalorder %s139, %s140
      %p151 = scmp.eq.s32.totalorder %s21, 0
      %p152 = por %p150, %p151
      %p153 = scmp.ne.s32.totalorder %s139, %s140
      %p154 = scmp.eq.s32.totalorder %s22, 1
      %p155 = por %p153, %p154
      %p157 = scmp.ne.s32.totalorder %s140, %s156
      %p158 = scmp.eq.s32.totalorder %s22, 0
      %p159 = por %p157, %p158
      %p160 = scmp.le.s32.totalorder 1, %s16
      %p161 = scmp.lt.s32.totalorder %s16, 3
      %p162 = pnand %p160, %p161
      %p163 = pneg %p162
      // Predicated region
      $region9: #{_forward_resident.1} parent=5 // pred_check
        _
      $region10: #{_forward_resident.1} parent=5 // pred_check_branch
        %165 = sbr.rel (%p162) target = $region12
      $region11: #{_forward_resident.1} parent=5 // pred_region
        %s166 = ssub.s32 %s16, 1
        // Predicated region
        $region13: #{_forward_resident.1} parent=11 // pred_check
          %p167 = pneg %p63
        $region14: #{_forward_resident.1} parent=11 // pred_check_branch
          %169 = sbr.rel (%p167) target = $region16
        $region15: #{_forward_resident.1} parent=11 // pred_region
          %171 = vsyncadd [#allocation3], 0
          %s172 = sshll.u32 %s1, 4
          %s173 = int_to_ptr.hbm [resolvable:$true] %s172
          %s174 = sshll.u32 [#allocation2], 4
          %s175 = int_to_ptr.vmem [resolvable:$true] %s174
          %180 = dma.hbm_to_vmem [thread:$0]  %s173, 4096, %s175, [#allocation3], 256, 256, 16
        $region16: #{_forward_resident.1} parent=11 // pred_fallthru
          _
        // Predicated region
        $region17: #{_forward_resident.1} parent=11 // pred_check
          %p181 = pneg %p84
        $region18: #{_forward_resident.1} parent=11 // pred_check_branch
          %183 = sbr.rel (%p181) target = $region20
        $region19: #{_forward_resident.1} parent=11 // pred_region
          _
        $region20: #{_forward_resident.1} parent=11 // pred_fallthru
          _
        // Predicated region
        $region21: #{_forward_resident.1} parent=11 // pred_check
          %p184 = pneg %p105
        $region22: #{_forward_resident.1} parent=11 // pred_check_branch
          %186 = sbr.rel (%p184) target = $region24
        $region23: #{_forward_resident.1} parent=11 // pred_region
          %188 = vsyncadd [#allocation6], 0
          %s189 = sshll.u32 %s3, 4
          %s190 = int_to_ptr.hbm [resolvable:$true] %s189
          %s191 = sshll.u32 [#allocation5], 4
          %s192 = int_to_ptr.vmem [resolvable:$true] %s191
          %197 = dma.hbm_to_vmem [thread:$0]  %s190, 2048, %s192, [#allocation6], 128, 128, 8
        $region24: #{_forward_resident.1} parent=11 // pred_fallthru
          _
        // Predicated region
        $region25: #{_forward_resident.1} parent=11 // pred_check
          %p198 = pneg %p126
        $region26: #{_forward_resident.1} parent=11 // pred_check_branch
          %200 = sbr.rel (%p198) target = $region28
        $region27: #{_forward_resident.1} parent=11 // pred_region
          _
        $region28: #{_forward_resident.1} parent=11 // pred_fallthru
          _
      $region12: #{_forward_resident.1} parent=5 // pred_fallthru
        _
      %p201 = scmp.lt.s32.totalorder %s16, 2
      // Predicated region
      $region29: #{_forward_resident.1} parent=5 // pred_check
        %p202 = pneg %p201
      $region30: #{_forward_resident.1} parent=5 // pred_check_branch
        %204 = sbr.rel (%p202) target = $region32
      $region31: #{_forward_resident.1} parent=5 // pred_region
        // Predicated region
        $region33: #{_forward_resident.1} parent=31 // pred_check
          %p205 = pneg %p36
        $region34: #{_forward_resident.1} parent=31 // pred_check_branch
          %207 = sbr.rel (%p205) target = $region36
        $region35: #{_forward_resident.1} parent=31 // pred_region
          %p208 = scmp.lt.s32.totalorder %s16, 1
          %s209 = scalar_select %p208, %s16, 1
          %s210 = smul.addr %s209, 8
          %s211 = scalar_lea.vmem %s0, %s210
        $region36: #{_forward_resident.1} parent=31 // pred_fallthru
          _
      $region32: #{_forward_resident.1} parent=5 // pred_fallthru
        _
      %p212 = scmp.le.s32.totalorder 1, %s16
      %p213 = scmp.lt.s32.totalorder %s16, 3
      %p214 = pnand %p212, %p213
      %p215 = pneg %p214
      // Predicated region
      $region37: #{_forward_resident.1} parent=5 // pred_check
        _
      $region38: #{_forward_resident.1} parent=5 // pred_check_branch
        %217 = sbr.rel (%p214) target = $region40
      $region39: #{_forward_resident.1} parent=5 // pred_region
        %s218 = ssub.s32 %s16, 1
        // Predicated region
        $region41: #{_forward_resident.1} parent=39 // pred_check
          %p219 = pneg %p63
        $region42: #{_forward_resident.1} parent=39 // pred_check_branch
          %221 = sbr.rel (%p219) target = $region44
        $region43: #{_forward_resident.1} parent=39 // pred_region
          %223 = dma.done [#allocation3], 4096
        $region44: #{_forward_resident.1} parent=39 // pred_fallthru
          _
        // Predicated region
        $region45: #{_forward_resident.1} parent=39 // pred_check
          %p224 = pneg %p105
        $region46: #{_forward_resident.1} parent=39 // pred_check_branch
          %226 = sbr.rel (%p224) target = $region48
        $region47: #{_forward_resident.1} parent=39 // pred_region
          %228 = dma.done [#allocation6], 2048
        $region48: #{_forward_resident.1} parent=39 // pred_fallthru
          _
        %p229 = scmp.lt.s32.totalorder %s21, 1
        %s230 = scalar_select %p229, %s21, 1
        %s231 = smul.addr %s230, 8
        %s232 = scalar_lea.vmem %s0, %s231
        %p233 = pneg %p42
        %p234 = pneg %p39
        %p235 = pneg %p63
        %p236 = pneg %p60
        %p237 = pneg %p84
        %p238 = pneg %p81
        %p239 = pneg %p105
        %p240 = pneg %p102
        %p241 = pneg %p126
        %p242 = pneg %p123
        %p243 = pneg %p152
        %p244 = pneg %p149
        %s245 = sand.u32 %s139, 1
        %s246 = scalar_lea.sflag [#allocation4], %s245
        %s247 = sand.u32 %s139, 1
        %s248 = smul.addr %s247, 8
        %s249 = scalar_lea.vmem [#allocation7], %s248
        %p250 = scmp.lt.s32.totalorder %s21, 1
        %s251 = scalar_select %p250, %s21, 1
        %s252 = smul.addr %s251, 8
        %s253 = scalar_lea.vmem %s0, %s252
        %v254 = vld [vmem:[%s253] sm:$0xff]
        %v255 = vld [vmem:[#allocation2] sm:$0xff]
        %v256 = vld [vmem:[#allocation2 + $0x8] sm:$0xff]
        %v257 = vld [vmem:[#allocation2 + $0x10] sm:$0xff]
        %v258 = vld [vmem:[#allocation2 + $0x18] sm:$0xff]
        %v259 = vld [vmem:[#allocation2 + $0x20] sm:$0xff]
        %v260 = vld [vmem:[#allocation2 + $0x28] sm:$0xff]
        %v261 = vld [vmem:[#allocation2 + $0x30] sm:$0xff]
        %v262 = vld [vmem:[#allocation2 + $0x38] sm:$0xff]
        %v263 = vld [vmem:[#allocation2 + $0x40] sm:$0xff]
        %v264 = vld [vmem:[#allocation2 + $0x48] sm:$0xff]
        %v265 = vld [vmem:[#allocation2 + $0x50] sm:$0xff]
        %v266 = vld [vmem:[#allocation2 + $0x58] sm:$0xff]
        %v267 = vld [vmem:[#allocation2 + $0x60] sm:$0xff]
        %v268 = vld [vmem:[#allocation2 + $0x68] sm:$0xff]
        %v269 = vld [vmem:[#allocation2 + $0x70] sm:$0xff]
        %v270 = vld [vmem:[#allocation2 + $0x78] sm:$0xff]
        %v271 = vld [vmem:[#allocation2 + $0x80] sm:$0xff]
        %v272 = vld [vmem:[#allocation2 + $0x88] sm:$0xff]
        %v273 = vld [vmem:[#allocation2 + $0x90] sm:$0xff]
        %v274 = vld [vmem:[#allocation2 + $0x98] sm:$0xff]
        %v275 = vld [vmem:[#allocation2 + $0xa0] sm:$0xff]
        %v276 = vld [vmem:[#allocation2 + $0xa8] sm:$0xff]
        %v277 = vld [vmem:[#allocation2 + $0xb0] sm:$0xff]
        %v278 = vld [vmem:[#allocation2 + $0xb8] sm:$0xff]
        %v279 = vld [vmem:[#allocation2 + $0xc0] sm:$0xff]
        %v280 = vld [vmem:[#allocation2 + $0xc8] sm:$0xff]
        %v281 = vld [vmem:[#allocation2 + $0xd0] sm:$0xff]
        %v282 = vld [vmem:[#allocation2 + $0xd8] sm:$0xff]
        %v283 = vld [vmem:[#allocation2 + $0xe0] sm:$0xff]
        %v284 = vld [vmem:[#allocation2 + $0xe8] sm:$0xff]
        %v285 = vld [vmem:[#allocation2 + $0xf0] sm:$0xff]
        %v286 = vld [vmem:[#allocation2 + $0xf8] sm:$0xff]
        %v287 = vld [vmem:[%s2] sm:$0x3]
        %v289 = vperm.slane %v287, 0
        %v290 = vperm.slane %v287, 1
        %293 = vmatpush.msra.mxu0 %v285
        %294 = vmatpush.msra.mxu0 %v283
        %295 = vmatpush.msra.mxu0 %v281
        %296 = vmatpush.msra.mxu0 %v279
        %297 = vmatpush.msra.mxu0 %v277
        %298 = vmatpush.msra.mxu0 %v275
        %299 = vmatpush.msra.mxu0 %v273
        %300 = vmatpush.msra.mxu0 %v271
        %301 = vmatpush.msra.mxu0 %v269
        %302 = vmatpush.msra.mxu0 %v267
        %303 = vmatpush.msra.mxu0 %v265
        %304 = vmatpush.msra.mxu0 %v263
        %305 = vmatpush.msra.mxu0 %v261
        %306 = vmatpush.msra.mxu0 %v259
        %307 = vmatpush.msra.mxu0 %v257
        %308 = vmatpush.msra.mxu0 %v255
        %309 = vmatmul.f32.gmra.mxu0 %v254
        %v310 = vpop.f32.mrf.mxu0
        %v311 = vadd.f32 %v289, %v310
        %312 = vdwg.mxu0
        %313 = vmatpush.msra.mxu0 %v286
        %314 = vmatpush.msra.mxu0 %v284
        %315 = vmatpush.msra.mxu0 %v282
        %316 = vmatpush.msra.mxu0 %v280
        %317 = vmatpush.msra.mxu0 %v278
        %318 = vmatpush.msra.mxu0 %v276
        %319 = vmatpush.msra.mxu0 %v274
        %320 = vmatpush.msra.mxu0 %v272
        %321 = vmatpush.msra.mxu0 %v270
        %322 = vmatpush.msra.mxu0 %v268
        %323 = vmatpush.msra.mxu0 %v266
        %324 = vmatpush.msra.mxu0 %v264
        %325 = vmatpush.msra.mxu0 %v262
        %326 = vmatpush.msra.mxu0 %v260
        %327 = vmatpush.msra.mxu0 %v258
        %328 = vmatpush.msra.mxu0 %v256
        %329 = vmatmul.f32.gmra.mxu0 %v254
        %v330 = vpop.f32.mrf.mxu0
        %v331 = vadd.f32 %v290, %v330
        %332 = vdwg.mxu0
        %v333 = vmax.f32 %v311, -1000.0
        %v334 = vmax.f32 %v331, -1000.0
        %v335 = vmin.f32 %v333, 1000.0
        %v336 = vmin.f32 %v334, 1000.0
        %v337 = vmax.f32 %v335, 0.0
        %v338 = vmin.f32 %v337, 6.0
        %v339 = vmul.f32 %v338, %v336
        %v340 = vld [vmem:[#allocation5] sm:$0xff]
        %v341 = vld [vmem:[#allocation5 + $0x8] sm:$0xff]
        %v342 = vld [vmem:[#allocation5 + $0x10] sm:$0xff]
        %v343 = vld [vmem:[#allocation5 + $0x18] sm:$0xff]
        %v344 = vld [vmem:[#allocation5 + $0x20] sm:$0xff]
        %v345 = vld [vmem:[#allocation5 + $0x28] sm:$0xff]
        %v346 = vld [vmem:[#allocation5 + $0x30] sm:$0xff]
        %v347 = vld [vmem:[#allocation5 + $0x38] sm:$0xff]
        %v348 = vld [vmem:[#allocation5 + $0x40] sm:$0xff]
        %v349 = vld [vmem:[#allocation5 + $0x48] sm:$0xff]
        %v350 = vld [vmem:[#allocation5 + $0x50] sm:$0xff]
        %v351 = vld [vmem:[#allocation5 + $0x58] sm:$0xff]
        %v352 = vld [vmem:[#allocation5 + $0x60] sm:$0xff]
        %v353 = vld [vmem:[#allocation5 + $0x68] sm:$0xff]
        %v354 = vld [vmem:[#allocation5 + $0x70] sm:$0xff]
        %v355 = vld [vmem:[#allocation5 + $0x78] sm:$0xff]
        %v356 = vld [vmem:[%s4] sm:$0x1]
        %v358 = vperm.slane %v356, 0
        %360 = vmatpush.msra.mxu0 %v355
        %361 = vmatpush.msra.mxu0 %v354
        %362 = vmatpush.msra.mxu0 %v353
        %363 = vmatpush.msra.mxu0 %v352
        %364 = vmatpush.msra.mxu0 %v351
        %365 = vmatpush.msra.mxu0 %v350
        %366 = vmatpush.msra.mxu0 %v349
        %367 = vmatpush.msra.mxu0 %v348
        %368 = vmatpush.msra.mxu0 %v347
        %369 = vmatpush.msra.mxu0 %v346
        %370 = vmatpush.msra.mxu0 %v345
        %371 = vmatpush.msra.mxu0 %v344
        %372 = vmatpush.msra.mxu0 %v343
        %373 = vmatpush.msra.mxu0 %v342
        %374 = vmatpush.msra.mxu0 %v341
        %375 = vmatpush.msra.mxu0 %v340
        %376 = vmatmul.f32.gmra.mxu0 %v339
        %v377 = vpop.f32.mrf.mxu0
        %v378 = vadd.f32 %v358, %v377
        %379 = vdwg.mxu0
        %380 = vst [vmem:[%s249] sm:$0xff] %v378
        %s381 = sand.u32 %s139, 1
        %s382 = scalar_lea.sflag [#allocation4], %s381
        %s383 = sand.u32 %s139, 1
        %s384 = smul.addr %s383, 8
        %s385 = scalar_lea.vmem [#allocation7], %s384
        // Predicated region
        $region49: #{_forward_resident.1} parent=39 // pred_check
          %p386 = pneg %p149
        $region50: #{_forward_resident.1} parent=39 // pred_check_branch
          %388 = sbr.rel (%p386) target = $region52
        $region51: #{_forward_resident.1} parent=39 // pred_region
          %390 = vsyncadd %s382, 0
          %s391 = smul.addr %s21, 8
          %s392 = scalar_lea.hbm %s5, %s391
          %s394 = sshll.u32 %s385, 4
          %s395 = int_to_ptr.vmem [resolvable:$true] %s394
          %s396 = sshll.u32 %s392, 4
          %s397 = int_to_ptr.hbm [resolvable:$true] %s396
          %399 = dma.vmem_to_hbm [thread:$0]  %s395, 128, %s397, %s382
        $region52: #{_forward_resident.1} parent=39 // pred_fallthru
          _
      $region40: #{_forward_resident.1} parent=5 // pred_fallthru
        _
      %p400 = scmp.le.s32.totalorder 2, %s16
      // Predicated region
      $region53: #{_forward_resident.1} parent=5 // pred_check
        %p401 = pneg %p400
      $region54: #{_forward_resident.1} parent=5 // pred_check_branch
        %403 = sbr.rel (%p401) target = $region56
      $region55: #{_forward_resident.1} parent=5 // pred_region
        %s404 = ssub.s32 %s16, 2
        // Predicated region
        $region57: #{_forward_resident.1} parent=55 // pred_check
          %p405 = pneg %p155
        $region58: #{_forward_resident.1} parent=55 // pred_check_branch
          %407 = sbr.rel (%p405) target = $region60
        $region59: #{_forward_resident.1} parent=55 // pred_region
          %s408 = sand.u32 %s140, 1
          %s409 = scalar_lea.sflag [#allocation4], %s408
          %s410 = sand.u32 %s140, 1
          %s411 = smul.addr %s410, 8
          %s412 = scalar_lea.vmem [#allocation7], %s411
          %414 = dma.done %s409, 128
        $region60: #{_forward_resident.1} parent=55 // pred_fallthru
          _
      $region56: #{_forward_resident.1} parent=5 // pred_fallthru
        _
    $region6: #{_forward_resident.1} parent=1 // loop_footer
      %s20 = sadd.s32 1, %s16
    $region7: #{_forward_resident.1} parent=1 // loop_footer_branch
      %15 = sbr.rel target = $region3
    $region8: #{_forward_resident.1} parent=1 // loop_exit
      _
    %415 = vsyncpa [#allocation3], 1
    %s416 = scalar_lea.sflag [#allocation3], 1
    %417 = vsyncpa %s416, 1
    %418 = vsyncpa [#allocation6], 1
    %419 = vsyncpa [#allocation4], 1
    %s420 = scalar_lea.sflag [#allocation4], 1
    %421 = vsyncpa %s420, 1

</llo_original>
